<compile_context>
chip_gen: v7x
topology: tpu7x:2x2x1
jax: 0.10.0
libtpu: 0.0.40
codegen_flags: <defaults>
</compile_context>

<pallas_src>
import functools

import jax
import jax.numpy as jnp
from jax.experimental import pallas as pl
from jax.experimental.pallas import tpu as pltpu


def _wmv_kernel(col_ref, row_ref, out_ref, *, p):
    j = pl.program_id(1)

    @pl.when(j == 0)
    def _():
        out_ref[...] = jnp.zeros_like(out_ref)

    a = col_ref[...]                      # [TM, 1]  gamma + s_neg (or -1e30)
    b = row_ref[...]                      # [1, TN]  s_pos        (or +1e30)
    base = jnp.maximum(a - b, 0.0)        # [TM, TN] = max(gamma - diff, 0)

    p_f = float(p)
    if p_f >= 1.0 and p_f.is_integer():
        # Exact integer power via trace-time exponentiation-by-squaring (VPU).
        k = int(p_f)
        result = None
        sq = base
        while k:
            if k & 1:
                result = sq if result is None else result * sq
            k >>= 1
            if k:
                sq = sq * sq
        vals = result
    else:
        # General power via EUP exp/log; masked entries (base == 0) forced to 0.
        vals = jnp.where(
            base > 0.0,
            jnp.exp(p_f * jnp.log(jnp.maximum(base, jnp.float32(1e-30)))),
            0.0)

    # Reduce the [TM, TN] tile to one (8, 128) vreg with pure VPU adds
    # (reshape splits exactly on (8, 128) vreg boundaries -> no data movement).
    tm, tn = vals.shape
    partial = jnp.sum(vals.reshape(tm // 8, 8, tn // 128, 128), axis=(0, 2))
    out_ref[...] += partial


def wmv_loss(inputs, target, p, gamma):
    """Pallas implementation of WMVLoss.forward."""
    inputs = jnp.asarray(inputs)
    target = jnp.asarray(target, jnp.int32).reshape(-1)
    n = int(target.shape[0])

    # --- XLA prologue (O(N*C), negligible) --------------------------------
    if inputs.ndim > 1:
        if inputs.shape[-1] < 2:
            raise ValueError("2-D inputs need at least 2 classes (column 1).")
        scores = jax.nn.softmax(inputs.astype(jnp.float32), axis=-1)[:, 1]
    else:
        scores = inputs.astype(jnp.float32)

    pos_mask = target == 1
    neg_mask = jnp.logical_not(pos_mask)

    big = jnp.float32(1e30)
    gamma_f = jnp.float32(float(gamma))
    col_vals = jnp.where(neg_mask, scores + gamma_f, -big)   # [n]
    row_vals = jnp.where(pos_mask, scores, big)              # [n]

    # --- Tiling / padding --------------------------------------------------
    if n > 512:
        tm, tn = 512, 512
    else:
        tm = max(8, ((n + 7) // 8) * 8)
        tn = max(128, ((n + 127) // 128) * 128)
    np_i = ((n + tm - 1) // tm) * tm
    np_j = ((n + tn - 1) // tn) * tn
    gi, gj = np_i // tm, np_j // tn

    # Padded rows/cols carry the sentinels -> contribute exactly 0.
    col = jnp.full((np_i, 1), -big, jnp.float32).at[:n, 0].set(col_vals)
    row = jnp.full((1, np_j), big, jnp.float32).at[0, :n].set(row_vals)

    kernel = functools.partial(_wmv_kernel, p=float(p))

    partials = pl.pallas_call(
        kernel,
        out_shape=jax.ShapeDtypeStruct((gi * 8, 128), jnp.float32),
        grid=(gi, gj),
        in_specs=[
            pl.BlockSpec((tm, 1), lambda i, j: (i, 0)),
            pl.BlockSpec((1, tn), lambda i, j: (0, j)),
        ],
        out_specs=pl.BlockSpec((8, 128), lambda i, j: (i, 0)),
        compiler_params=pltpu.CompilerParams(
            dimension_semantics=("parallel", "arbitrary")),
    )(col, row)

    return jnp.sum(partials) / jnp.float32(n)


if __name__ == "__main__":
    import numpy as np

    # "Parameters" of the module (deterministic, set in-script).
    p, gamma = 2.0, 0.3

    key = jax.random.PRNGKey(0)
    k1, k2 = jax.random.split(key)
    N, C = 16, 2
    inputs = jax.random.normal(k1, (N, C), dtype=jnp.float32)
    target = (jax.random.uniform(k2, (N,)) > 0.5).astype(jnp.int32)

    loss = wmv_loss(inputs, target, p, gamma)
    loss = jax.block_until_ready(loss)

    # Pure-numpy reference (mirrors the PyTorch forward).
    x = np.asarray(inputs, dtype=np.float64)
    t = np.asarray(target)
    e = np.exp(x - x.max(-1, keepdims=True))
    probs = e / e.sum(-1, keepdims=True)
    scores = probs[:, 1]
    sp = scores[t == 1]
    sn = scores[t != 1]
    d = sp[None, :] - sn[:, None]
    sel = d[d < gamma]
    ref = float(np.sum((gamma - sel) ** p) / N)

    assert abs(float(loss) - ref) < 1e-4 * max(1.0, abs(ref)), (float(loss), ref)
    print("KERNEL_OK")
</pallas_src>

<mosaic_0001>
module attributes {stable_mosaic.version = 11 : i64} {
  func.func @_wmv_kernel(%arg0: i32, %arg1: i32, %arg2: memref<16x1xf32, #tpu.memory_space<vmem>>, %arg3: memref<1x128xf32, #tpu.memory_space<vmem>>, %arg4: memref<8x128xf32, #tpu.memory_space<vmem>>) attributes {dimension_semantics = [#tpu.dimension_semantics<parallel>, #tpu.dimension_semantics<arbitrary>], iteration_bounds = array<i64: 1, 1>, scalar_prefetch = 0 : i64, scratch_operands = 0 : i64, tpu.core_type = #tpu.core_type<tc>, window_params = [{transform_indices = @transform_0, window_bounds = array<i64: 16, 1>}, {transform_indices = @transform_1, window_bounds = array<i64: 1, 128>}, {transform_indices = @transform_2, window_bounds = array<i64: 8, 128>}]} {
    %c0_i32 = arith.constant 0 : i32
    %0 = arith.cmpi eq, %arg1, %c0_i32 : i32
    %1 = arith.extui %0 : i1 to i32
    %c0_i32_0 = arith.constant 0 : i32
    %2 = arith.cmpi ne, %1, %c0_i32_0 : i32
    scf.if %2 {
      %cst_9 = arith.constant 0.000000e+00 : f32
      %16 = vector.broadcast %cst_9 : f32 to vector<8x128xf32>
      %c0_10 = arith.constant 0 : index
      %c0_11 = arith.constant 0 : index
      %17 = vector.load %arg4[%c0_10, %c0_11] : memref<8x128xf32, #tpu.memory_space<vmem>>, vector<8x128xf32>
      tpu.vector_store %arg4[%c0_10, %c0_11], %16 {strides = array<i32>} : memref<8x128xf32, #tpu.memory_space<vmem>>, vector<8x128xf32>,
    } else {
    }
    %c0 = arith.constant 0 : index
    %c0_1 = arith.constant 0 : index
    %3 = vector.load %arg2[%c0, %c0_1] : memref<16x1xf32, #tpu.memory_space<vmem>>, vector<16x1xf32>
    %c0_2 = arith.constant 0 : index
    %c0_3 = arith.constant 0 : index
    %4 = vector.load %arg3[%c0_2, %c0_3] : memref<1x128xf32, #tpu.memory_space<vmem>>, vector<1x128xf32>
    %5 = vector.broadcast %3 : vector<16x1xf32> to vector<16x128xf32>
    %6 = vector.broadcast %4 : vector<1x128xf32> to vector<16x128xf32>
    %7 = arith.subf %5, %6 : vector<16x128xf32>
    %cst = arith.constant 0.000000e+00 : f32
    %8 = vector.broadcast %cst : f32 to vector<16x128xf32>
    %9 = arith.maximumf %7, %8 : vector<16x128xf32>
    %10 = arith.mulf %9, %9 : vector<16x128xf32>
    %11 = vector.shape_cast %10 : vector<16x128xf32> to vector<2x8x1x128xf32>
    %cst_4 = arith.constant dense<0.000000e+00> : vector<8x128xf32>
    %12 = vector.multi_reduction <add>, %11, %cst_4 [0, 2] : vector<2x8x1x128xf32> to vector<8x128xf32>
    %c0_5 = arith.constant 0 : index
    %c0_6 = arith.constant 0 : index
    %13 = vector.load %arg4[%c0_5, %c0_6] : memref<8x128xf32, #tpu.memory_space<vmem>>, vector<8x128xf32>
    %14 = arith.addf %13, %12 : vector<8x128xf32>
    %c0_7 = arith.constant 0 : index
    %c0_8 = arith.constant 0 : index
    %15 = vector.load %arg4[%c0_7, %c0_8] : memref<8x128xf32, #tpu.memory_space<vmem>>, vector<8x128xf32>
    tpu.vector_store %arg4[%c0_7, %c0_8], %14 {strides = array<i32>} : memref<8x128xf32, #tpu.memory_space<vmem>>, vector<8x128xf32>,
    return
  }
  func.func @transform_0(%arg0: i32, %arg1: i32) -> (i32, i32) {
    %c0_i32 = arith.constant 0 : i32
    %c0_i32_0 = arith.constant 0 : i32
    return %arg0, %c0_i32 : i32, i32
  }
  func.func @transform_1(%arg0: i32, %arg1: i32) -> (i32, i32) {
    %c0_i32 = arith.constant 0 : i32
    %c0_i32_0 = arith.constant 0 : i32
    return %c0_i32, %arg1 : i32, i32
  }
  func.func @transform_2(%arg0: i32, %arg1: i32) -> (i32, i32) {
    %c0_i32 = arith.constant 0 : i32
    %c0_i32_0 = arith.constant 0 : i32
    return %arg0, %c0_i32 : i32, i32
  }
}

</mosaic_0001>

<llo_original>
// kernel: tpu_custom_call.1
$region0: #{tpu_custom_call.1}
  #allocation0 [shape = 'u32[]', space=smem, size = 0x4, offset = 0x4, fixed_abs, tag = 'smem constant byte address 0x4 - core index']
  #allocation1 [shape = 'u32[144,128]{1,0:T(1,128)}', space=vmem, size = 0x12000, scoped, tag = 'internal scratch']
  %s0 = inlined_call_operand.vmem [shape: f32[16,1], index: 0, kind: input, shape index: {}]
  %s1 = inlined_call_operand.vmem [shape: f32[1,128], index: 1, kind: input, shape index: {}]
  %s2 = inlined_call_operand.hbm [shape: f32[8,128], index: 2, kind: output, shape index: {}]
  %s3 = sld [smem:[#allocation0]]
  $region22: #{tpu_custom_call.1} parent=0
    _
  %s5 = ssub.s32 1, %s3
  %s6 = scalar_select 0, %s5, %s3
  $region1: #{tpu_custom_call.1} parent=0
    #allocation2 [shape = 'u8[4096]{0}', space=vmem, size = 0x1000, scoped, tag = 'output window, operand 0, single buffered']
    #allocation3 [shape = 's32[1]{0}', space=sflag, size = 0x4, scoped, tag = 'scoped memory for tpu_custom_call.1']
    %7 = vsyncpa [#allocation3], 0
    // Predicated region
    $region2: #{tpu_custom_call.1} parent=1 // pred_check
      _
    $region3: #{tpu_custom_call.1} parent=1 // pred_check_branch
      %9 = sbr.rel (0) target = $region5
    $region4: #{tpu_custom_call.1} parent=1 // pred_region
      _
    $region5: #{tpu_custom_call.1} parent=1 // pred_fallthru
      _
    // Predicated region
    $region6: #{tpu_custom_call.1} parent=1 // pred_check
      _
    $region7: #{tpu_custom_call.1} parent=1 // pred_check_branch
      %11 = sbr.rel (0) target = $region9
    $region8: #{tpu_custom_call.1} parent=1 // pred_region
      _
    $region9: #{tpu_custom_call.1} parent=1 // pred_fallthru
      _
    %p12 = scmp.eq.s32.totalorder 0, 0
    // Predicated region
    $region10: #{tpu_custom_call.1} parent=1 // pred_check
      %p13 = pneg %p12
    $region11: #{tpu_custom_call.1} parent=1 // pred_check_branch
      %15 = sbr.rel (%p13) target = $region13
    $region12: #{tpu_custom_call.1} parent=1 // pred_region
      %16 = vst [vmem:[#allocation2] sm:$0xff] 0.0
    $region13: #{tpu_custom_call.1} parent=1 // pred_fallthru
      _
    %v17 = vld [vmem:[%s0] sm:$0xff]
    %v18 = vld [vmem:[%s0 + $0x8] sm:$0xff]
    %v19 = vld [vmem:[%s1] sm:$0x1]
    %21 = vset.pattern.permute.xlu0 0
    %22 = vperm.xlu0 %21, %v17
    %v23 = vpop.permute.xlu0 %22
    %26 = vset.pattern.permute.xlu0 0
    %27 = vperm.xlu0 %26, %v18
    %v28 = vpop.permute.xlu0 %27
    %v31 = vlaneseq
    %v32 = vshrl.u32 %v31, 7
    %v33 = vsub.s32 0, %v32
    %v34 = vrot.slane %v19, %v33
    %v36 = vsub.f32 %v23, %v34
    %v37 = vsub.f32 %v28, %v34
    %v38 = vmax.f32 %v36, 0.0
    %v39 = vmax.f32 %v37, 0.0
    %v40 = vmul.f32 %v38, %v38
    %v41 = vmul.f32 %v39, %v39
    %v44 = vcombine.high %v40, %v40
    %v46 = vunpack.c.l.s4 1966171168
    %v47 = vunpack.c.0.s8 %v46
    %v48 = vlaneseq
    %v49 = vshrl.u32 %v48, 7
    %v50 = vsub.s32 %v47, %v49
    %v51 = vrot.slane %v40, %v50
    %v53 = vunpack.c.l.s4 1966171168
    %v54 = vunpack.c.0.s8 %v53
    %v55 = vlaneseq
    %v56 = vshrl.u32 %v55, 7
    %v57 = vsub.s32 %v54, %v56
    %v58 = vrot.slane %v44, %v57
    %v59 = vcombine.high %v51, %v51
    %v60 = vcombine.high %v58, %v58
    %v62 = vunpack.c.l.s4 1966171168
    %v63 = vunpack.c.0.s8 %v62
    %v64 = vlaneseq
    %v65 = vshrl.u32 %v64, 7
    %v66 = vsub.s32 %v63, %v65
    %v67 = vrot.slane %v51, %v66
    %v69 = vunpack.c.l.s4 1966171168
    %v70 = vunpack.c.0.s8 %v69
    %v71 = vlaneseq
    %v72 = vshrl.u32 %v71, 7
    %v73 = vsub.s32 %v70, %v72
    %v74 = vrot.slane %v58, %v73
    %v76 = vunpack.c.l.s4 1966171168
    %v77 = vunpack.c.0.s8 %v76
    %v78 = vlaneseq
    %v79 = vshrl.u32 %v78, 7
    %v80 = vsub.s32 %v77, %v79
    %v81 = vrot.slane %v59, %v80
    %v83 = vunpack.c.l.s4 1966171168
    %v84 = vunpack.c.0.s8 %v83
    %v85 = vlaneseq
    %v86 = vshrl.u32 %v85, 7
    %v87 = vsub.s32 %v84, %v86
    %v88 = vrot.slane %v60, %v87
    %v89 = vcombine.high %v67, %v67
    %v90 = vcombine.high %v74, %v74
    %v91 = vcombine.high %v81, %v81
    %v92 = vcombine.high %v88, %v88
    %v93 = vcombine.high %v41, %v41
    %v95 = vunpack.c.l.s4 1966171168
    %v96 = vunpack.c.0.s8 %v95
    %v97 = vlaneseq
    %v98 = vshrl.u32 %v97, 7
    %v99 = vsub.s32 %v96, %v98
    %v100 = vrot.slane %v41, %v99
    %v102 = vunpack.c.l.s4 1966171168
    %v103 = vunpack.c.0.s8 %v102
    %v104 = vlaneseq
    %v105 = vshrl.u32 %v104, 7
    %v106 = vsub.s32 %v103, %v105
    %v107 = vrot.slane %v93, %v106
    %v108 = vcombine.high %v100, %v100
    %v109 = vcombine.high %v107, %v107
    %v111 = vunpack.c.l.s4 1966171168
    %v112 = vunpack.c.0.s8 %v111
    %v113 = vlaneseq
    %v114 = vshrl.u32 %v113, 7
    %v115 = vsub.s32 %v112, %v114
    %v116 = vrot.slane %v100, %v115
    %v118 = vunpack.c.l.s4 1966171168
    %v119 = vunpack.c.0.s8 %v118
    %v120 = vlaneseq
    %v121 = vshrl.u32 %v120, 7
    %v122 = vsub.s32 %v119, %v121
    %v123 = vrot.slane %v107, %v122
    %v125 = vunpack.c.l.s4 1966171168
    %v126 = vunpack.c.0.s8 %v125
    %v127 = vlaneseq
    %v128 = vshrl.u32 %v127, 7
    %v129 = vsub.s32 %v126, %v128
    %v130 = vrot.slane %v108, %v129
    %v132 = vunpack.c.l.s4 1966171168
    %v133 = vunpack.c.0.s8 %v132
    %v134 = vlaneseq
    %v135 = vshrl.u32 %v134, 7
    %v136 = vsub.s32 %v133, %v135
    %v137 = vrot.slane %v109, %v136
    %v138 = vcombine.high %v116, %v116
    %v139 = vcombine.high %v123, %v123
    %v140 = vcombine.high %v130, %v130
    %v141 = vcombine.high %v137, %v137
    %vm158 = vcmask 1040384
    %v159 = vsel %vm158, %v67, 0.0
    %v160 = vsel %vm158, %v116, 0.0
    %v161 = vadd.f32 %v159, %v160
    %v162 = vrot.slane %v161, 4
    %v163 = vadd.f32 %v161, %v162
    %v164 = vrot.slane %v163, 2
    %v165 = vadd.f32 %v163, %v164
    %v166 = vrot.slane %v165, 1
    %v167 = vadd.f32 %v165, %v166
    %v168 = vsel %vm158, %v81, 0.0
    %v169 = vsel %vm158, %v130, 0.0
    %v170 = vadd.f32 %v168, %v169
    %v171 = vrot.slane %v170, 4
    %v172 = vadd.f32 %v170, %v171
    %v173 = vrot.slane %v172, 2
    %v174 = vadd.f32 %v172, %v173
    %v175 = vrot.slane %v174, 1
    %v176 = vadd.f32 %v174, %v175
    %v177 = vsel %vm158, %v89, 0.0
    %v178 = vsel %vm158, %v138, 0.0
    %v179 = vadd.f32 %v177, %v178
    %v180 = vrot.slane %v179, 4
    %v181 = vadd.f32 %v179, %v180
    %v182 = vrot.slane %v181, 2
    %v183 = vadd.f32 %v181, %v182
    %v184 = vrot.slane %v183, 1
    %v185 = vadd.f32 %v183, %v184
    %v186 = vsel %vm158, %v91, 0.0
    %v187 = vsel %vm158, %v140, 0.0
    %v188 = vadd.f32 %v186, %v187
    %v189 = vrot.slane %v188, 4
    %v190 = vadd.f32 %v188, %v189
    %v191 = vrot.slane %v190, 2
    %v192 = vadd.f32 %v190, %v191
    %v193 = vrot.slane %v192, 1
    %v194 = vadd.f32 %v192, %v193
    %v195 = vsel %vm158, %v74, 0.0
    %v196 = vsel %vm158, %v123, 0.0
    %v197 = vadd.f32 %v195, %v196
    %v198 = vrot.slane %v197, 4
    %v199 = vadd.f32 %v197, %v198
    %v200 = vrot.slane %v199, 2
    %v201 = vadd.f32 %v199, %v200
    %v202 = vrot.slane %v201, 1
    %v203 = vadd.f32 %v201, %v202
    %v204 = vsel %vm158, %v88, 0.0
    %v205 = vsel %vm158, %v137, 0.0
    %v206 = vadd.f32 %v204, %v205
    %v207 = vrot.slane %v206, 4
    %v208 = vadd.f32 %v206, %v207
    %v209 = vrot.slane %v208, 2
    %v210 = vadd.f32 %v208, %v209
    %v211 = vrot.slane %v210, 1
    %v212 = vadd.f32 %v210, %v211
    %v213 = vsel %vm158, %v90, 0.0
    %v214 = vsel %vm158, %v139, 0.0
    %v215 = vadd.f32 %v213, %v214
    %v216 = vrot.slane %v215, 4
    %v217 = vadd.f32 %v215, %v216
    %v218 = vrot.slane %v217, 2
    %v219 = vadd.f32 %v217, %v218
    %v220 = vrot.slane %v219, 1
    %v221 = vadd.f32 %v219, %v220
    %v222 = vsel %vm158, %v92, 0.0
    %v223 = vsel %vm158, %v141, 0.0
    %v224 = vadd.f32 %v222, %v223
    %v225 = vrot.slane %v224, 4
    %v226 = vadd.f32 %v224, %v225
    %v227 = vrot.slane %v226, 2
    %v228 = vadd.f32 %v226, %v227
    %v229 = vrot.slane %v228, 1
    %v230 = vadd.f32 %v228, %v229
    %v231 = vld [vmem:[#allocation2] sm:$0xff]
    %vm240 = vcmask 1041409
    %v241 = vsel %vm240, %v176, %v167
    %vm242 = vcmask 1042434
    %v243 = vsel %vm242, %v185, %v241
    %vm244 = vcmask 1043459
    %v245 = vsel %vm244, %v194, %v243
    %vm246 = vcmask 1044484
    %v247 = vsel %vm246, %v203, %v245
    %vm248 = vcmask 1045509
    %v249 = vsel %vm248, %v212, %v247
    %vm250 = vcmask 1046534
    %v251 = vsel %vm250, %v221, %v249
    %vm252 = vcmask 1047559
    %v253 = vsel %vm252, %v230, %v251
    %v255 = vadd.f32 %v231, %v253
    %256 = vst [vmem:[#allocation2] sm:$0xff] %v255
    // Predicated region
    $region14: #{tpu_custom_call.1} parent=1 // pred_check
      _
    $region15: #{tpu_custom_call.1} parent=1 // pred_check_branch
      %258 = sbr.rel (0) target = $region17
    $region16: #{tpu_custom_call.1} parent=1 // pred_region
      %s260 = ssub.s32 128, 128
      %261 = vsyncadd [#allocation3], %s260
      %s263 = sshll.u32 [#allocation2], 4
      %s264 = int_to_ptr.vmem [resolvable:$true] %s263
      %266 = dma.vmem_to_hbm [thread:$0]  %s264, 128, %s2, [#allocation3]
    $region17: #{tpu_custom_call.1} parent=1 // pred_fallthru
      _
    // Predicated region
    $region18: #{tpu_custom_call.1} parent=1 // pred_check
      _
    $region19: #{tpu_custom_call.1} parent=1 // pred_check_branch
      %268 = sbr.rel (0) target = $region21
    $region20: #{tpu_custom_call.1} parent=1 // pred_region
      %269 = dma.done [#allocation3], 128
    $region21: #{tpu_custom_call.1} parent=1 // pred_fallthru
      _
    %270 = vsyncpa [#allocation3], 1

</llo_original>
